<compile_context>
chip_gen: v7x
topology: tpu7x:2x2x1
jax: 0.10.0
libtpu: 0.0.40
codegen_flags: <defaults>
</compile_context>

<pallas_src>
import jax
import jax.numpy as jnp
from jax.experimental import pallas as pl
from jax.experimental.pallas import tpu as pltpu


def _round_up(n, m):
    return ((n + m - 1) // m) * m


def _mlp_kernel(xT_ref, w1_ref, b1_ref, w2_ref, b2_ref, w3_ref, b3_ref, o_ref):
    # xT_ref: (in_dim, TM) f32 ; w*: (out, in) compute dtype ; b*: (out, 1) f32.
    # Feature-major: lanes = batch, so every activation below is lane-dense.
    xT = xT_ref[...].astype(w1_ref.dtype)                                 # f32 -> bf16 on VPU
    h1 = jnp.dot(w1_ref[...], xT, preferred_element_type=jnp.float32)    # (64, TM), MXU f32 acc
    h1 = jnp.maximum(h1 + b1_ref[...], 0.0)                              # bias + ReLU in f32
    h2 = jnp.dot(w2_ref[...], h1.astype(w2_ref.dtype),
                 preferred_element_type=jnp.float32)                     # (32, TM)
    h2 = jnp.maximum(h2 + b2_ref[...], 0.0)
    o = jnp.dot(w3_ref[...], h2.astype(w3_ref.dtype),
                preferred_element_type=jnp.float32) + b3_ref[...]        # (out_dim, TM)
    o_ref[...] = o.astype(o_ref.dtype)


def ann_forward(x, params, *, tm=4096, compute_dtype=jnp.bfloat16,
                out_dtype=jnp.float32, training=False):
    """ANNModel forward.  x: (B, seq_len, features) f32 -> (B, seq_len, output_size).

    compute_dtype=bf16 deviates from the PyTorch f32 forward by ~1e-3 relative;
    pass compute_dtype=jnp.float32 for bit-closer results (kernel is HBM-bound
    either way).
    """
    if training:
        # TODO(synk): training-mode dropout not implemented.
        raise NotImplementedError("only eval-mode (dropout = identity) forward is implemented")

    w1, b1, w2, b2, w3, b3 = params              # weights (out, in), biases (out,)
    B, S, F = x.shape
    in_dim = S * F
    h1_dim, h2_dim, out_dim = w1.shape[0], w2.shape[0], w3.shape[0]
    assert w1.shape == (h1_dim, in_dim) and w2.shape == (h2_dim, h1_dim)
    assert w3.shape == (out_dim, h2_dim) and out_dim % S == 0

    # Feature-major input: lanes = batch.  The transpose is the only wrapper
    # pass over x; dtype stays f32 (cast to compute_dtype inside the kernel).
    xT = x.reshape(B, in_dim).T                                  # (in_dim, B)

    w1c, w2c, w3c = (w.astype(compute_dtype) for w in (w1, w2, w3))
    b1f, b2f, b3f = (b.reshape(-1, 1).astype(jnp.float32) for b in (b1, b2, b3))

    # Batch (lane) tile: multiple of 128, big enough to amortize grid-step
    # overhead, capped so v7x's two TensorCores each get at least one step.
    b128 = _round_up(B, 128)
    tm = min(_round_up(tm, 128), b128)
    if pl.cdiv(B, tm) < 2 and b128 >= 256:                       # >= 2 steps for 2-TC v7x
        tm = _round_up(pl.cdiv(b128, 2), 128)
    grid = (pl.cdiv(B, tm),)                                     # partial last block is masked

    flops = 2 * B * (in_dim * h1_dim + h1_dim * h2_dim + h2_dim * out_dim)
    bytes_accessed = (
        B * in_dim * x.dtype.itemsize                            # x (f32, read in-kernel)
        + B * out_dim * jnp.dtype(out_dtype).itemsize            # output
        + sum(w.size * w.dtype.itemsize for w in (w1c, w2c, w3c))
        + sum(b.size * b.dtype.itemsize for b in (b1f, b2f, b3f)))
    cost = pl.CostEstimate(flops=flops, transcendentals=0,
                           bytes_accessed=bytes_accessed)

    oT = pl.pallas_call(
        _mlp_kernel,
        out_shape=jax.ShapeDtypeStruct((out_dim, B), out_dtype),
        grid=grid,
        in_specs=[
            pl.BlockSpec((in_dim, tm), lambda i: (0, i)),        # x^T tile (pipelined)
            pl.BlockSpec(w1c.shape, lambda i: (0, 0)),           # weights stay resident
            pl.BlockSpec(b1f.shape, lambda i: (0, 0)),
            pl.BlockSpec(w2c.shape, lambda i: (0, 0)),
            pl.BlockSpec(b2f.shape, lambda i: (0, 0)),
            pl.BlockSpec(w3c.shape, lambda i: (0, 0)),
            pl.BlockSpec(b3f.shape, lambda i: (0, 0)),
        ],
        out_specs=pl.BlockSpec((out_dim, tm), lambda i: (0, i)), # lane-dense output
        compiler_params=pltpu.CompilerParams(
            dimension_semantics=("parallel",)),                  # megacore on v7x
        cost_estimate=cost,
    )(xT, w1c, b1f, w2c, b2f, w3c, b3f)

    # (out_dim, B) -> (B, seq_len, output_size); matches PyTorch's .view(B, seq, -1).
    return oT.T.reshape(B, S, -1)


def init_params(key, input_size=4, hidden_dims=(64, 32), output_size=1, seq_len=6):
    """PyTorch-style Linear params: weight (out, in), bias (out,), U(+-1/sqrt(fan_in))."""
    dims = [input_size * seq_len] + list(hidden_dims) + [output_size * seq_len]
    params = []
    for fan_in, fan_out in zip(dims[:-1], dims[1:]):
        key, kw, kb = jax.random.split(key, 3)
        bound = 1.0 / (fan_in ** 0.5)
        w = jax.random.uniform(kw, (fan_out, fan_in), jnp.float32, -bound, bound)
        b = jax.random.uniform(kb, (fan_out,), jnp.float32, -bound, bound)
        params += [w, b]
    return tuple(params)


def ann_reference(x, params, compute_dtype=jnp.float32):
    """Pure-JAX reference with the same (optional) low-precision dot operands."""
    w1, b1, w2, b2, w3, b3 = params
    B, S, _ = x.shape
    xf = x.reshape(B, -1).astype(compute_dtype)
    w1c, w2c, w3c = (w.astype(compute_dtype) for w in (w1, w2, w3))
    h1 = jnp.maximum(jnp.dot(xf, w1c.T, preferred_element_type=jnp.float32) + b1, 0.0)
    h2 = jnp.maximum(jnp.dot(h1.astype(compute_dtype), w2c.T,
                             preferred_element_type=jnp.float32) + b2, 0.0)
    o = jnp.dot(h2.astype(compute_dtype), w3c.T,
                preferred_element_type=jnp.float32) + b3
    return o.reshape(B, S, -1)


if __name__ == "__main__":
    key = jax.random.PRNGKey(0)
    k_x, k_p, k_x2 = jax.random.split(key, 3)

    batch, seq_len, features = 2, 6, 4
    x = jax.random.normal(k_x, (batch, seq_len, features), jnp.float32)
    params = init_params(k_p, input_size=features, hidden_dims=(64, 32),
                         output_size=1, seq_len=seq_len)

    out = jax.block_until_ready(ann_forward(x, params))
    assert out.shape == (batch, seq_len, 1), out.shape

    # Tight check against a reference using the same bf16 dot operands.
    ref_bf16 = ann_reference(x, params, compute_dtype=jnp.bfloat16)
    assert jnp.allclose(out, ref_bf16, atol=2e-3, rtol=2e-3), \
        float(jnp.max(jnp.abs(out - ref_bf16)))
    # Loose sanity check against the pure-f32 (PyTorch-equivalent) reference.
    ref_f32 = ann_reference(x, params, compute_dtype=jnp.float32)
    assert jnp.allclose(out, ref_f32, atol=1e-1, rtol=1e-1)

    # Multi-step grid + partial last block (exercises the masked tail writeback
    # and the >=2-grid-step split used for v7x megacore sharding).
    big_b = 384
    xb = jax.random.normal(k_x2, (big_b, seq_len, features), jnp.float32)
    out_b = jax.block_until_ready(ann_forward(xb, params))
    assert out_b.shape == (big_b, seq_len, 1), out_b.shape
    ref_b = ann_reference(xb, params, compute_dtype=jnp.bfloat16)
    assert jnp.allclose(out_b, ref_b, atol=2e-3, rtol=2e-3), \
        float(jnp.max(jnp.abs(out_b - ref_b)))

    print("KERNEL_OK")
</pallas_src>

<mosaic_0001>
module attributes {stable_mosaic.version = 11 : i64} {
  func.func @_mlp_kernel(%arg0: i32, %arg1: memref<24x128xf32, #tpu.memory_space<vmem>>, %arg2: memref<64x24xbf16, #tpu.memory_space<vmem>>, %arg3: memref<64x1xf32, #tpu.memory_space<vmem>>, %arg4: memref<32x64xbf16, #tpu.memory_space<vmem>>, %arg5: memref<32x1xf32, #tpu.memory_space<vmem>>, %arg6: memref<6x32xbf16, #tpu.memory_space<vmem>>, %arg7: memref<6x1xf32, #tpu.memory_space<vmem>>, %arg8: memref<6x128xf32, #tpu.memory_space<vmem>>) attributes {dimension_semantics = [#tpu.dimension_semantics<parallel>], iteration_bounds = array<i64: 1>, scalar_prefetch = 0 : i64, scratch_operands = 0 : i64, tpu.core_type = #tpu.core_type<tc>, window_params = [{transform_indices = @transform_0, window_bounds = array<i64: 24, 128>}, {pipeline_mode = #tpu.pipeline_mode<synchronous>, transform_indices = @transform_1, window_bounds = array<i64: 64, 24>}, {pipeline_mode = #tpu.pipeline_mode<synchronous>, transform_indices = @transform_2, window_bounds = array<i64: 64, 1>}, {pipeline_mode = #tpu.pipeline_mode<synchronous>, transform_indices = @transform_3, window_bounds = array<i64: 32, 64>}, {pipeline_mode = #tpu.pipeline_mode<synchronous>, transform_indices = @transform_4, window_bounds = array<i64: 32, 1>}, {pipeline_mode = #tpu.pipeline_mode<synchronous>, transform_indices = @transform_5, window_bounds = array<i64: 6, 32>}, {pipeline_mode = #tpu.pipeline_mode<synchronous>, transform_indices = @transform_6, window_bounds = array<i64: 6, 1>}, {transform_indices = @transform_7, window_bounds = array<i64: 6, 128>}]} {
    %c0 = arith.constant 0 : index
    %c0_0 = arith.constant 0 : index
    %0 = vector.load %arg1[%c0, %c0_0] : memref<24x128xf32, #tpu.memory_space<vmem>>, vector<24x128xf32>
    %1 = arith.truncf %0 : vector<24x128xf32> to vector<24x128xbf16>
    %c0_1 = arith.constant 0 : index
    %c0_2 = arith.constant 0 : index
    %2 = vector.load %arg2[%c0_1, %c0_2] : memref<64x24xbf16, #tpu.memory_space<vmem>>, vector<64x24xbf16>
    %cst = arith.constant dense<0.000000e+00> : vector<64x128xf32>
    %3 = tpu.matmul %2, %1, %cst {dimension_numbers = #tpu.dot_dimension_numbers<[1], [0], [0], [1], [0, 0, 1, 1], [], []>} : vector<64x24xbf16>, vector<24x128xbf16>, vector<64x128xf32> -> vector<64x128xf32>
    %c0_3 = arith.constant 0 : index
    %c0_4 = arith.constant 0 : index
    %4 = vector.load %arg3[%c0_3, %c0_4] : memref<64x1xf32, #tpu.memory_space<vmem>>, vector<64x1xf32>
    %5 = vector.broadcast %4 : vector<64x1xf32> to vector<64x128xf32>
    %6 = arith.addf %3, %5 : vector<64x128xf32>
    %cst_5 = arith.constant 0.000000e+00 : f32
    %7 = vector.broadcast %cst_5 : f32 to vector<64x128xf32>
    %8 = arith.maximumf %6, %7 : vector<64x128xf32>
    %c0_6 = arith.constant 0 : index
    %c0_7 = arith.constant 0 : index
    %9 = vector.load %arg4[%c0_6, %c0_7] : memref<32x64xbf16, #tpu.memory_space<vmem>>, vector<32x64xbf16>
    %10 = arith.truncf %8 : vector<64x128xf32> to vector<64x128xbf16>
    %cst_8 = arith.constant dense<0.000000e+00> : vector<32x128xf32>
    %11 = tpu.matmul %9, %10, %cst_8 {dimension_numbers = #tpu.dot_dimension_numbers<[1], [0], [0], [1], [0, 0, 1, 1], [], []>} : vector<32x64xbf16>, vector<64x128xbf16>, vector<32x128xf32> -> vector<32x128xf32>
    %c0_9 = arith.constant 0 : index
    %c0_10 = arith.constant 0 : index
    %12 = vector.load %arg5[%c0_9, %c0_10] : memref<32x1xf32, #tpu.memory_space<vmem>>, vector<32x1xf32>
    %13 = vector.broadcast %12 : vector<32x1xf32> to vector<32x128xf32>
    %14 = arith.addf %11, %13 : vector<32x128xf32>
    %cst_11 = arith.constant 0.000000e+00 : f32
    %15 = vector.broadcast %cst_11 : f32 to vector<32x128xf32>
    %16 = arith.maximumf %14, %15 : vector<32x128xf32>
    %c0_12 = arith.constant 0 : index
    %c0_13 = arith.constant 0 : index
    %17 = vector.load %arg6[%c0_12, %c0_13] : memref<6x32xbf16, #tpu.memory_space<vmem>>, vector<6x32xbf16>
    %18 = arith.truncf %16 : vector<32x128xf32> to vector<32x128xbf16>
    %cst_14 = arith.constant dense<0.000000e+00> : vector<6x128xf32>
    %19 = tpu.matmul %17, %18, %cst_14 {dimension_numbers = #tpu.dot_dimension_numbers<[1], [0], [0], [1], [0, 0, 1, 1], [], []>} : vector<6x32xbf16>, vector<32x128xbf16>, vector<6x128xf32> -> vector<6x128xf32>
    %c0_15 = arith.constant 0 : index
    %c0_16 = arith.constant 0 : index
    %20 = vector.load %arg7[%c0_15, %c0_16] : memref<6x1xf32, #tpu.memory_space<vmem>>, vector<6x1xf32>
    %21 = vector.broadcast %20 : vector<6x1xf32> to vector<6x128xf32>
    %22 = arith.addf %19, %21 : vector<6x128xf32>
    %c0_17 = arith.constant 0 : index
    %c0_18 = arith.constant 0 : index
    %23 = vector.load %arg8[%c0_17, %c0_18] : memref<6x128xf32, #tpu.memory_space<vmem>>, vector<6x128xf32>
    tpu.vector_store %arg8[%c0_17, %c0_18], %22 {strides = array<i32>} : memref<6x128xf32, #tpu.memory_space<vmem>>, vector<6x128xf32>,
    return
  }
  func.func @transform_0(%arg0: i32) -> (i32, i32) {
    %c0_i32 = arith.constant 0 : i32
    %c0_i32_0 = arith.constant 0 : i32
    return %c0_i32, %arg0 : i32, i32
  }
  func.func @transform_1(%arg0: i32) -> (i32, i32) {
    %c0_i32 = arith.constant 0 : i32
    %c0_i32_0 = arith.constant 0 : i32
    %c0_i32_1 = arith.constant 0 : i32
    return %c0_i32, %c0_i32_0 : i32, i32
  }
  func.func @transform_2(%arg0: i32) -> (i32, i32) {
    %c0_i32 = arith.constant 0 : i32
    %c0_i32_0 = arith.constant 0 : i32
    %c0_i32_1 = arith.constant 0 : i32
    return %c0_i32, %c0_i32_0 : i32, i32
  }
  func.func @transform_3(%arg0: i32) -> (i32, i32) {
    %c0_i32 = arith.constant 0 : i32
    %c0_i32_0 = arith.constant 0 : i32
    %c0_i32_1 = arith.constant 0 : i32
    return %c0_i32, %c0_i32_0 : i32, i32
  }
  func.func @transform_4(%arg0: i32) -> (i32, i32) {
    %c0_i32 = arith.constant 0 : i32
    %c0_i32_0 = arith.constant 0 : i32
    %c0_i32_1 = arith.constant 0 : i32
    return %c0_i32, %c0_i32_0 : i32, i32
  }
  func.func @transform_5(%arg0: i32) -> (i32, i32) {
    %c0_i32 = arith.constant 0 : i32
    %c0_i32_0 = arith.constant 0 : i32
    %c0_i32_1 = arith.constant 0 : i32
    return %c0_i32, %c0_i32_0 : i32, i32
  }
  func.func @transform_6(%arg0: i32) -> (i32, i32) {
    %c0_i32 = arith.constant 0 : i32
    %c0_i32_0 = arith.constant 0 : i32
    %c0_i32_1 = arith.constant 0 : i32
    return %c0_i32, %c0_i32_0 : i32, i32
  }
  func.func @transform_7(%arg0: i32) -> (i32, i32) {
    %c0_i32 = arith.constant 0 : i32
    %c0_i32_0 = arith.constant 0 : i32
    return %c0_i32, %arg0 : i32, i32
  }
}

</mosaic_0001>

<llo_original>
// kernel: tpu_custom_call.1
$region0: #{tpu_custom_call.1}
  #allocation0 [shape = 'u32[]', space=smem, size = 0x4, offset = 0x4, fixed_abs, tag = 'smem constant byte address 0x4 - core index']
  #allocation1 [shape = 'u32[144,128]{1,0:T(1,128)}', space=vmem, size = 0x12000, scoped, tag = 'internal scratch']
  %s0 = inlined_call_operand.vmem [shape: f32[24,2], index: 0, kind: input, shape index: {}]
  %s1 = inlined_call_operand.vmem [shape: bf16[64,24], index: 1, kind: input, shape index: {}]
  %s2 = inlined_call_operand.vmem [shape: f32[64,1], index: 2, kind: input, shape index: {}]
  %s3 = inlined_call_operand.vmem [shape: bf16[32,64], index: 3, kind: input, shape index: {}]
  %s4 = inlined_call_operand.vmem [shape: f32[32,1], index: 4, kind: input, shape index: {}]
  %s5 = inlined_call_operand.vmem [shape: bf16[6,32], index: 5, kind: input, shape index: {}]
  %s6 = inlined_call_operand.vmem [shape: f32[6,1], index: 6, kind: input, shape index: {}]
  %s7 = inlined_call_operand.vmem [shape: f32[6,2], index: 7, kind: output, shape index: {}]
  %s8 = sld [smem:[#allocation0]]
  $region38: #{tpu_custom_call.1} parent=0
    _
  %s10 = ssub.s32 1, %s8
  %s11 = scalar_select 0, %s10, %s8
  // Predicated region
  $region2: #{tpu_custom_call.1} parent=0 // pred_check
    _
  $region3: #{tpu_custom_call.1} parent=0 // pred_check_branch
    %13 = sbr.rel (0) target = $region5
  $region4: #{tpu_custom_call.1} parent=0 // pred_region
    _
  $region5: #{tpu_custom_call.1} parent=0 // pred_fallthru
    _
  // Predicated region
  $region6: #{tpu_custom_call.1} parent=0 // pred_check
    _
  $region7: #{tpu_custom_call.1} parent=0 // pred_check_branch
    %15 = sbr.rel (0) target = $region9
  $region8: #{tpu_custom_call.1} parent=0 // pred_region
    _
  $region9: #{tpu_custom_call.1} parent=0 // pred_fallthru
    _
  // Predicated region
  $region10: #{tpu_custom_call.1} parent=0 // pred_check
    _
  $region11: #{tpu_custom_call.1} parent=0 // pred_check_branch
    %17 = sbr.rel (0) target = $region13
  $region12: #{tpu_custom_call.1} parent=0 // pred_region
    _
  $region13: #{tpu_custom_call.1} parent=0 // pred_fallthru
    _
  // Predicated region
  $region14: #{tpu_custom_call.1} parent=0 // pred_check
    _
  $region15: #{tpu_custom_call.1} parent=0 // pred_check_branch
    %19 = sbr.rel (0) target = $region17
  $region16: #{tpu_custom_call.1} parent=0 // pred_region
    _
  $region17: #{tpu_custom_call.1} parent=0 // pred_fallthru
    _
  // Predicated region
  $region18: #{tpu_custom_call.1} parent=0 // pred_check
    _
  $region19: #{tpu_custom_call.1} parent=0 // pred_check_branch
    %21 = sbr.rel (0) target = $region21
  $region20: #{tpu_custom_call.1} parent=0 // pred_region
    _
  $region21: #{tpu_custom_call.1} parent=0 // pred_fallthru
    _
  // Predicated region
  $region22: #{tpu_custom_call.1} parent=0 // pred_check
    _
  $region23: #{tpu_custom_call.1} parent=0 // pred_check_branch
    %23 = sbr.rel (0) target = $region25
  $region24: #{tpu_custom_call.1} parent=0 // pred_region
    _
  $region25: #{tpu_custom_call.1} parent=0 // pred_fallthru
    _
  // Predicated region
  $region26: #{tpu_custom_call.1} parent=0 // pred_check
    _
  $region27: #{tpu_custom_call.1} parent=0 // pred_check_branch
    %25 = sbr.rel (0) target = $region29
  $region28: #{tpu_custom_call.1} parent=0 // pred_region
    _
  $region29: #{tpu_custom_call.1} parent=0 // pred_fallthru
    _
  %v27 = vld [vmem:[%s0] sm:$0xff]
  %v28 = vld [vmem:[%s0 + $0x8] sm:$0xff]
  %v29 = vld [vmem:[%s0 + $0x10] sm:$0xff]
  %v30 = vpack.c.bf16 %v28, %v27
  %v31 = vpack.c.bf16 %v29, %v29
  %v32 = vld [vmem:[%s1] sm:$0xf]
  %v33 = vld [vmem:[%s1 + $0x4] sm:$0xf]
  %v34 = vld [vmem:[%s1 + $0x8] sm:$0xf]
  %v35 = vld [vmem:[%s1 + $0xc] sm:$0xf]
  %v36 = vld [vmem:[%s1 + $0x10] sm:$0xf]
  %v37 = vld [vmem:[%s1 + $0x14] sm:$0xf]
  %v38 = vld [vmem:[%s1 + $0x18] sm:$0xf]
  %v39 = vld [vmem:[%s1 + $0x1c] sm:$0xf]
  %v40 = vld [vmem:[%s2] sm:$0xff]
  %v41 = vld [vmem:[%s2 + $0x8] sm:$0xff]
  %v42 = vld [vmem:[%s2 + $0x10] sm:$0xff]
  %v43 = vld [vmem:[%s2 + $0x18] sm:$0xff]
  %v44 = vld [vmem:[%s2 + $0x20] sm:$0xff]
  %v45 = vld [vmem:[%s2 + $0x28] sm:$0xff]
  %v46 = vld [vmem:[%s2 + $0x30] sm:$0xff]
  %v47 = vld [vmem:[%s2 + $0x38] sm:$0xff]
  %49 = vset.pattern.permute.xlu0 0
  %50 = vperm.xlu0 %49, %v40
  %v51 = vpop.permute.xlu0 %50
  %54 = vset.pattern.permute.xlu0 0
  %55 = vperm.xlu0 %54, %v41
  %v56 = vpop.permute.xlu0 %55
  %59 = vset.pattern.permute.xlu0 0
  %60 = vperm.xlu0 %59, %v42
  %v61 = vpop.permute.xlu0 %60
  %64 = vset.pattern.permute.xlu0 0
  %65 = vperm.xlu0 %64, %v43
  %v66 = vpop.permute.xlu0 %65
  %69 = vset.pattern.permute.xlu0 0
  %70 = vperm.xlu0 %69, %v44
  %v71 = vpop.permute.xlu0 %70
  %74 = vset.pattern.permute.xlu0 0
  %75 = vperm.xlu0 %74, %v45
  %v76 = vpop.permute.xlu0 %75
  %79 = vset.pattern.permute.xlu0 0
  %80 = vperm.xlu0 %79, %v46
  %v81 = vpop.permute.xlu0 %80
  %84 = vset.pattern.permute.xlu0 0
  %85 = vperm.xlu0 %84, %v47
  %v86 = vpop.permute.xlu0 %85
  %v96 = vunpack.c.l.b16 %v32
  %v97 = vunpack.c.l.b16 %v33
  %v98 = vunpack.c.l.b16 %v34
  %v99 = vunpack.c.l.b16 %v35
  %v100 = vunpack.c.l.b16 %v36
  %v101 = vunpack.c.l.b16 %v37
  %v102 = vunpack.c.l.b16 %v38
  %v103 = vunpack.c.l.b16 %v39
  %v104 = vpack.c.b16 %v97, %v96
  %v105 = vpack.c.b16 %v99, %v98
  %v106 = vpack.c.b16 %v101, %v100
  %v107 = vpack.c.b16 %v103, %v102
  %vm108 = vcmask 195584
  %v110 = vsel %vm108, %v104, 0
  %v113 = vsel %vm108, %v105, 0
  %v116 = vsel %vm108, %v106, 0
  %v119 = vsel %vm108, %v107, 0
  %vm121 = vcmask 1043456
  %v123 = vsel %vm121, %v31, 0
  %125 = vmatprep.subr.bf16.mxu0 0
  %126 = vmatpush1.bf16.msra.mxu0 %v30
  %127 = vmatprep.subr.bf16.mxu0 0
  %128 = vmatpush1.bf16.msra.mxu0 %v123
  %129 = vmatprep.subr.bf16.mxu0 0
  %130 = vmatpush1.bf16.msra.mxu0 0
  %131 = vmatprep.subr.bf16.mxu0 0
  %132 = vmatpush1.bf16.msra.mxu0 0
  %133 = vmatprep.subr.bf16.mxu0 0
  %134 = vmatpush1.bf16.msra.mxu0 0
  %135 = vmatprep.subr.bf16.mxu0 0
  %136 = vmatpush1.bf16.msra.mxu0 0
  %137 = vmatprep.subr.bf16.mxu0 0
  %138 = vmatpush1.bf16.msra.mxu0 0
  %139 = vmatprep.subr.bf16.mxu0 0
  %140 = vmatpush1.bf16.msra.mxu0 0
  %141 = vmatprep.subr.bf16.mxu0 0
  %142 = vmatpush1.bf16.msra.mxu0 0
  %143 = vmatprep.subr.bf16.mxu0 0
  %144 = vmatpush1.bf16.msra.mxu0 0
  %145 = vmatprep.subr.bf16.mxu0 0
  %146 = vmatpush1.bf16.msra.mxu0 0
  %147 = vmatprep.subr.bf16.mxu0 0
  %148 = vmatpush1.bf16.msra.mxu0 0
  %149 = vmatprep.subr.bf16.mxu0 0
  %150 = vmatpush1.bf16.msra.mxu0 0
  %151 = vmatprep.subr.bf16.mxu0 0
  %152 = vmatpush1.bf16.msra.mxu0 0
  %153 = vmatprep.subr.bf16.mxu0 0
  %154 = vmatpush1.bf16.msra.mxu0 0
  %155 = vmatprep.subr.bf16.mxu0 0
  %156 = vmatpush1.bf16.msra.mxu0 0
  %157 = vmatprep.mubr.bf16.mxu0 0
  %158 = vmatmul.mubr.bf16.gmra.mrb[0].mxu0 %v110
  %v159 = vpop.f32.mrb[0].mxu0
  %v160 = vadd.f32 %v51, %v159
  %v161 = vpop.f32.mrb[0].mxu0
  %v162 = vpop.f32.mrb[0].mxu0
  %v163 = vadd.f32 %v56, %v162
  %v164 = vpop.f32.mrb[0].mxu0
  %165 = vmatprep.mubr.bf16.mxu0 0
  %166 = vmatmul.mubr.bf16.gmra.mrb[0].mxu0 %v113
  %v167 = vpop.f32.mrb[0].mxu0
  %v168 = vadd.f32 %v61, %v167
  %v169 = vpop.f32.mrb[0].mxu0
  %v170 = vpop.f32.mrb[0].mxu0
  %v171 = vadd.f32 %v66, %v170
  %v172 = vpop.f32.mrb[0].mxu0
  %173 = vmatprep.mubr.bf16.mxu0 0
  %174 = vmatmul.mubr.bf16.gmra.mrb[0].mxu0 %v116
  %v175 = vpop.f32.mrb[0].mxu0
  %v176 = vadd.f32 %v71, %v175
  %v177 = vpop.f32.mrb[0].mxu0
  %v178 = vpop.f32.mrb[0].mxu0
  %v179 = vadd.f32 %v76, %v178
  %v180 = vpop.f32.mrb[0].mxu0
  %181 = vmatprep.mubr.bf16.mxu0 0
  %182 = vmatmul.mubr.bf16.gmra.mrb[0].mxu0 %v119
  %v183 = vpop.f32.mrb[0].mxu0
  %v184 = vadd.f32 %v81, %v183
  %v185 = vpop.f32.mrb[0].mxu0
  %v186 = vpop.f32.mrb[0].mxu0
  %v187 = vadd.f32 %v86, %v186
  %v188 = vpop.f32.mrb[0].mxu0
  %189 = vdwg.mxu0
  %v190 = vmax.f32 %v160, 0.0
  %v191 = vmax.f32 %v163, 0.0
  %v192 = vmax.f32 %v168, 0.0
  %v193 = vmax.f32 %v171, 0.0
  %v194 = vmax.f32 %v176, 0.0
  %v195 = vmax.f32 %v179, 0.0
  %v196 = vmax.f32 %v184, 0.0
  %v197 = vmax.f32 %v187, 0.0
  %v198 = vld [vmem:[%s3] sm:$0xf]
  %v199 = vld [vmem:[%s3 + $0x4] sm:$0xf]
  %v200 = vld [vmem:[%s3 + $0x8] sm:$0xf]
  %v201 = vld [vmem:[%s3 + $0xc] sm:$0xf]
  %v202 = vpack.c.bf16 %v191, %v190
  %v203 = vpack.c.bf16 %v193, %v192
  %v204 = vpack.c.bf16 %v195, %v194
  %v205 = vpack.c.bf16 %v197, %v196
  %v206 = vld [vmem:[%s4] sm:$0xff]
  %v207 = vld [vmem:[%s4 + $0x8] sm:$0xff]
  %v208 = vld [vmem:[%s4 + $0x10] sm:$0xff]
  %v209 = vld [vmem:[%s4 + $0x18] sm:$0xff]
  %211 = vset.pattern.permute.xlu0 0
  %212 = vperm.xlu0 %211, %v206
  %v213 = vpop.permute.xlu0 %212
  %216 = vset.pattern.permute.xlu0 0
  %217 = vperm.xlu0 %216, %v207
  %v218 = vpop.permute.xlu0 %217
  %221 = vset.pattern.permute.xlu0 0
  %222 = vperm.xlu0 %221, %v208
  %v223 = vpop.permute.xlu0 %222
  %226 = vset.pattern.permute.xlu0 0
  %227 = vperm.xlu0 %226, %v209
  %v228 = vpop.permute.xlu0 %227
  %v234 = vunpack.c.l.b16 %v198
  %v235 = vunpack.c.l.b16 %v199
  %v236 = vunpack.c.l.b16 %v200
  %v237 = vunpack.c.l.b16 %v201
  %v238 = vpack.c.b16 %v235, %v234
  %v239 = vpack.c.b16 %v237, %v236
  %vm240 = vcmask 523264
  %v242 = vsel %vm240, %v238, 0
  %v245 = vsel %vm240, %v239, 0
  %247 = vmatprep.subr.bf16.mxu0 0
  %248 = vmatpush1.bf16.msra.mxu0 %v202
  %249 = vmatprep.subr.bf16.mxu0 0
  %250 = vmatpush1.bf16.msra.mxu0 %v203
  %251 = vmatprep.subr.bf16.mxu0 0
  %252 = vmatpush1.bf16.msra.mxu0 %v204
  %253 = vmatprep.subr.bf16.mxu0 0
  %254 = vmatpush1.bf16.msra.mxu0 %v205
  %255 = vmatprep.subr.bf16.mxu0 0
  %256 = vmatpush1.bf16.msra.mxu0 0
  %257 = vmatprep.subr.bf16.mxu0 0
  %258 = vmatpush1.bf16.msra.mxu0 0
  %259 = vmatprep.subr.bf16.mxu0 0
  %260 = vmatpush1.bf16.msra.mxu0 0
  %261 = vmatprep.subr.bf16.mxu0 0
  %262 = vmatpush1.bf16.msra.mxu0 0
  %263 = vmatprep.subr.bf16.mxu0 0
  %264 = vmatpush1.bf16.msra.mxu0 0
  %265 = vmatprep.subr.bf16.mxu0 0
  %266 = vmatpush1.bf16.msra.mxu0 0
  %267 = vmatprep.subr.bf16.mxu0 0
  %268 = vmatpush1.bf16.msra.mxu0 0
  %269 = vmatprep.subr.bf16.mxu0 0
  %270 = vmatpush1.bf16.msra.mxu0 0
  %271 = vmatprep.subr.bf16.mxu0 0
  %272 = vmatpush1.bf16.msra.mxu0 0
  %273 = vmatprep.subr.bf16.mxu0 0
  %274 = vmatpush1.bf16.msra.mxu0 0
  %275 = vmatprep.subr.bf16.mxu0 0
  %276 = vmatpush1.bf16.msra.mxu0 0
  %277 = vmatprep.subr.bf16.mxu0 0
  %278 = vmatpush1.bf16.msra.mxu0 0
  %279 = vmatprep.mubr.bf16.mxu0 0
  %280 = vmatmul.mubr.bf16.gmra.mrb[0].mxu0 %v242
  %v281 = vpop.f32.mrb[0].mxu0
  %v282 = vadd.f32 %v213, %v281
  %v283 = vpop.f32.mrb[0].mxu0
  %v284 = vpop.f32.mrb[0].mxu0
  %v285 = vadd.f32 %v218, %v284
  %v286 = vpop.f32.mrb[0].mxu0
  %287 = vmatprep.mubr.bf16.mxu0 0
  %288 = vmatmul.mubr.bf16.gmra.mrb[0].mxu0 %v245
  %v289 = vpop.f32.mrb[0].mxu0
  %v290 = vadd.f32 %v223, %v289
  %v291 = vpop.f32.mrb[0].mxu0
  %v292 = vpop.f32.mrb[0].mxu0
  %v293 = vadd.f32 %v228, %v292
  %v294 = vpop.f32.mrb[0].mxu0
  %295 = vdwg.mxu0
  %v296 = vmax.f32 %v282, 0.0
  %v297 = vmax.f32 %v285, 0.0
  %v298 = vmax.f32 %v290, 0.0
  %v299 = vmax.f32 %v293, 0.0
  %v300 = vld [vmem:[%s5] sm:$0x7]
  %v301 = vpack.c.bf16 %v297, %v296
  %v302 = vpack.c.bf16 %v299, %v298
  %v303 = vld [vmem:[%s6] sm:$0x3f]
  %305 = vset.pattern.permute.xlu0 0
  %306 = vperm.xlu0 %305, %v303
  %v307 = vpop.permute.xlu0 %306
  %vm309 = vcmask 261120
  %v311 = vsel %vm309, %v300, 0
  %313 = vmatprep.subr.bf16.mxu0 0
  %314 = vmatpush1.bf16.msra.mxu0 %v301
  %315 = vmatprep.subr.bf16.mxu0 0
  %316 = vmatpush1.bf16.msra.mxu0 %v302
  %317 = vmatprep.subr.bf16.mxu0 0
  %318 = vmatpush1.bf16.msra.mxu0 0
  %319 = vmatprep.subr.bf16.mxu0 0
  %320 = vmatpush1.bf16.msra.mxu0 0
  %321 = vmatprep.subr.bf16.mxu0 0
  %322 = vmatpush1.bf16.msra.mxu0 0
  %323 = vmatprep.subr.bf16.mxu0 0
  %324 = vmatpush1.bf16.msra.mxu0 0
  %325 = vmatprep.subr.bf16.mxu0 0
  %326 = vmatpush1.bf16.msra.mxu0 0
  %327 = vmatprep.subr.bf16.mxu0 0
  %328 = vmatpush1.bf16.msra.mxu0 0
  %329 = vmatprep.subr.bf16.mxu0 0
  %330 = vmatpush1.bf16.msra.mxu0 0
  %331 = vmatprep.subr.bf16.mxu0 0
  %332 = vmatpush1.bf16.msra.mxu0 0
  %333 = vmatprep.subr.bf16.mxu0 0
  %334 = vmatpush1.bf16.msra.mxu0 0
  %335 = vmatprep.subr.bf16.mxu0 0
  %336 = vmatpush1.bf16.msra.mxu0 0
  %337 = vmatprep.subr.bf16.mxu0 0
  %338 = vmatpush1.bf16.msra.mxu0 0
  %339 = vmatprep.subr.bf16.mxu0 0
  %340 = vmatpush1.bf16.msra.mxu0 0
  %341 = vmatprep.subr.bf16.mxu0 0
  %342 = vmatpush1.bf16.msra.mxu0 0
  %343 = vmatprep.subr.bf16.mxu0 0
  %344 = vmatpush1.bf16.msra.mxu0 0
  %345 = vmatprep.mubr.bf16.mxu0 0
  %346 = vmatmul.mubr.bf16.gmra.mrb[0].mxu0 %v311
  %v347 = vpop.f32.mrb[0].mxu0
  %v348 = vadd.f32 %v307, %v347
  %v349 = vpop.f32.mrb[0].mxu0
  %v350 = vpop.f32.mrb[0].mxu0
  %v351 = vpop.f32.mrb[0].mxu0
  %352 = vdwg.mxu0
  %353 = vst [vmem:[%s7] sm:$0x3f] %v348
  // Predicated region
  $region30: #{tpu_custom_call.1} parent=0 // pred_check
    _
  $region31: #{tpu_custom_call.1} parent=0 // pred_check_branch
    %355 = sbr.rel (0) target = $region33
  $region32: #{tpu_custom_call.1} parent=0 // pred_region
    _
  $region33: #{tpu_custom_call.1} parent=0 // pred_fallthru
    _
  // Predicated region
  $region34: #{tpu_custom_call.1} parent=0 // pred_check
    _
  $region35: #{tpu_custom_call.1} parent=0 // pred_check_branch
    %357 = sbr.rel (0) target = $region37
  $region36: #{tpu_custom_call.1} parent=0 // pred_region
    _
  $region37: #{tpu_custom_call.1} parent=0 // pred_fallthru
    _

</llo_original>
